<compile_context>
chip_gen: v6e
topology: v6e:2x2x1
jax: 0.10.0
libtpu: 0.0.40
codegen_flags: <defaults>
</compile_context>

<pallas_src>
import functools

import jax
import jax.numpy as jnp
from jax.experimental import pallas as pl
from jax.experimental.pallas import tpu as pltpu


LN_EPS = 1e-5


def _round_up(x, m):
    return ((x + m - 1) // m) * m


def _pooler_end_logits_kernel(xh_ref, xs_ref, w0h_ref, w0s_ref, b0_ref, g_ref,
                              beta_ref, w1_ref, b1_ref, o_ref):
    """One row-tile of dense_0 -> tanh -> LayerNorm -> dense_1.

    xh_ref  : (TR, Hh)  hidden_states rows           (matmul dtype, e.g. bf16)
    xs_ref  : (TR, Hs)  start_positions rows         (matmul dtype)
    w0h_ref : (Hh, H)   top rows of dense_0 weight   (matmul dtype, VMEM-resident)
    w0s_ref : (Hs, H)   bottom rows of dense_0 weight
    b0_ref  : (1, H)    dense_0 bias                 (f32)
    g_ref   : (1, H)    LayerNorm gamma              (f32)
    beta_ref: (1, H)    LayerNorm beta               (f32)
    w1_ref  : (H, Cp)   dense_1 weight, C padded to 128 lanes (matmul dtype)
    b1_ref  : (1, Cp)   dense_1 bias, padded         (f32)
    o_ref   : (TR, Cp)  output logits (lane-dense)
    """
    hidden = w0h_ref.shape[1]

    # dense_0, concat-free: [xh | xs] @ [W0h ; W0s] == xh @ W0h + xs @ W0s.
    # Native-dtype MXU matmuls with f32 accumulation.
    h = jnp.dot(xh_ref[...], w0h_ref[...], preferred_element_type=jnp.float32)
    h = h + jnp.dot(xs_ref[...], w0s_ref[...], preferred_element_type=jnp.float32)
    h = h + b0_ref[...].astype(jnp.float32)

    # tanh activation (EUP), f32.
    h = jnp.tanh(h)

    # LayerNorm over the feature axis, f32 stats, single fused reduction pass.
    inv_h = jnp.float32(1.0 / hidden)
    s1 = jnp.sum(h, axis=-1, keepdims=True)
    s2 = jnp.sum(h * h, axis=-1, keepdims=True)
    mean = s1 * inv_h
    var = jnp.maximum(s2 * inv_h - mean * mean, 0.0)
    h = (h - mean) * jax.lax.rsqrt(var + jnp.float32(LN_EPS))
    h = h * g_ref[...].astype(jnp.float32) + beta_ref[...].astype(jnp.float32)

    # dense_1: cast back to the weight dtype for the native-rate MXU path.
    out = jnp.dot(h.astype(w1_ref.dtype), w1_ref[...],
                  preferred_element_type=jnp.float32)
    out = out + b1_ref[...].astype(jnp.float32)

    o_ref[...] = out.astype(o_ref.dtype)


@functools.partial(jax.jit, static_argnames=("block_rows", "matmul_dtype"))
def pooler_end_logits(hidden_states, start_positions, params, *,
                      block_rows=256, matmul_dtype=jnp.bfloat16):
    """hidden_states: [B, S, Hh], start_positions: [B, S, Hs], Hh + Hs == hidden_size."""
    w0, b0, gamma, beta, w1, b1 = params
    B, S, Hh = hidden_states.shape
    Hs = start_positions.shape[-1]
    H = Hh + Hs
    C = w1.shape[-1]
    assert w0.shape == (H, H)

    out_dtype = hidden_states.dtype
    rows = B * S
    padded_rows = _round_up(rows, block_rows)
    Cp = _round_up(max(C, 128), 128)          # lane-dense (128-multiple) logits

    # Flatten to row view; pad rows so the last tile is full (extra rows are
    # computed on zeros and sliced off afterwards — the pipeline is row-wise
    # independent so padding never contaminates real rows).
    xh = hidden_states.reshape(rows, Hh)
    xs = start_positions.reshape(rows, Hs)
    if padded_rows != rows:
        xh = jnp.pad(xh, ((0, padded_rows - rows), (0, 0)))
        xs = jnp.pad(xs, ((0, padded_rows - rows), (0, 0)))
    xh = xh.astype(matmul_dtype)
    xs = xs.astype(matmul_dtype)

    # Parameter prep (in a real model this is done once at weight-load time):
    # split W0 by input rows (kills the concat), pad W1/b1 to 128 lanes,
    # keep all bias/LN params in f32.
    w0h = w0[:Hh, :].astype(matmul_dtype)
    w0s = w0[Hh:, :].astype(matmul_dtype)
    w1p = jnp.pad(w1, ((0, 0), (0, Cp - C))).astype(matmul_dtype)
    b1p = jnp.pad(b1, ((0, 0), (0, Cp - C))).astype(jnp.float32)
    b0f = b0.astype(jnp.float32)
    gf = gamma.astype(jnp.float32)
    betaf = beta.astype(jnp.float32)

    grid = (padded_rows // block_rows,)

    # Whole-array VMEM residents: loaded once for the kernel's lifetime,
    # no per-grid-step double buffering of constant blocks.
    vmem_resident = pl.BlockSpec(memory_space=pltpu.MemorySpace.VMEM)

    out = pl.pallas_call(
        _pooler_end_logits_kernel,
        out_shape=jax.ShapeDtypeStruct((padded_rows, Cp), out_dtype),
        grid_spec=pltpu.PrefetchScalarGridSpec(
            num_scalar_prefetch=0,
            grid=grid,
            in_specs=[
                pl.BlockSpec((block_rows, Hh), lambda i: (i, 0)),  # xh tile
                pl.BlockSpec((block_rows, Hs), lambda i: (i, 0)),  # xs tile
                vmem_resident,   # W0[:Hh, :]
                vmem_resident,   # W0[Hh:, :]
                vmem_resident,   # b0
                vmem_resident,   # gamma
                vmem_resident,   # beta
                vmem_resident,   # W1 (padded)
                vmem_resident,   # b1 (padded)
            ],
            out_specs=pl.BlockSpec((block_rows, Cp), lambda i: (i, 0)),
        ),
        compiler_params=pltpu.CompilerParams(
            dimension_semantics=("parallel",),          # shards row tiles across TCs (v7x)
            vmem_limit_bytes=48 * 1024 * 1024,          # > v5e's 16 MiB default, < v7x's 64 MiB physical
        ),
    )(xh, xs, w0h, w0s, b0f, gf, betaf, w1p, b1p)

    return out[:rows, :C].reshape(B, S, C)


def reference(hidden_states, start_positions, params):
    """Pure-JAX f32 reference mirroring the PyTorch forward."""
    w0, b0, gamma, beta, w1, b1 = params
    x = jnp.concatenate([hidden_states, start_positions], axis=-1)
    x = x @ w0 + b0[0]
    x = jnp.tanh(x)
    mean = jnp.mean(x, axis=-1, keepdims=True)
    var = jnp.mean((x - mean) ** 2, axis=-1, keepdims=True)
    x = (x - mean) * jax.lax.rsqrt(var + LN_EPS)
    x = x * gamma[0] + beta[0]
    return x @ w1 + b1[0]


def init_params(key, hidden_size, num_classes):
    """Deterministic synthetic parameters (shapes from the module __init__)."""
    k0, k1, k2, k3, k4, k5 = jax.random.split(key, 6)
    H, C = hidden_size, num_classes
    # Linear weights stored pre-transposed as (in_features, out_features).
    w0 = jax.random.normal(k0, (H, H), jnp.float32) * (1.0 / jnp.sqrt(H))
    b0 = jax.random.normal(k1, (1, H), jnp.float32) * 0.02
    gamma = 1.0 + 0.1 * jax.random.normal(k2, (1, H), jnp.float32)
    beta = 0.02 * jax.random.normal(k3, (1, H), jnp.float32)
    w1 = jax.random.normal(k4, (H, C), jnp.float32) * (1.0 / jnp.sqrt(H))
    b1 = jax.random.normal(k5, (1, C), jnp.float32) * 0.02
    return (w0, b0, gamma, beta, w1, b1)


if __name__ == "__main__":
    key = jax.random.PRNGKey(0)
    B, S = 2, 8
    hidden_size, num_classes = 32, 6
    Hh, Hs = 24, 8            # Hh + Hs == hidden_size (dense_0 input dim)

    kh, ks, kp = jax.random.split(key, 3)
    hidden_states = jax.random.normal(kh, (B, S, Hh), jnp.float32)
    start_positions = jax.random.normal(ks, (B, S, Hs), jnp.float32)
    params = init_params(kp, hidden_size, num_classes)

    ref = reference(hidden_states, start_positions, params)

    # f32 matmul path with small tiles: exercises a multi-step grid, tight check.
    out_f32 = pooler_end_logits(hidden_states, start_positions, params,
                                block_rows=8, matmul_dtype=jnp.float32)
    out_f32 = jax.block_until_ready(out_f32)
    assert out_f32.shape == (B, S, num_classes)
    assert jnp.allclose(out_f32, ref, atol=1e-4, rtol=1e-4), "f32 path mismatch vs reference"

    # Default fast path: bf16 matmuls, 256-row tiles (exercises row padding).
    # Loose tolerance accounts for bf16 quantization of activations/weights.
    out_fast = pooler_end_logits(hidden_states, start_positions, params)
    out_fast = jax.block_until_ready(out_fast)
    assert out_fast.shape == (B, S, num_classes)
    assert jnp.allclose(out_fast, ref, atol=1e-1, rtol=1e-1), "bf16 path mismatch vs reference"

    print("KERNEL_OK")
</pallas_src>

<mosaic_0001>
module attributes {stable_mosaic.version = 11 : i64} {
  func.func @_pooler_end_logits_kernel(%arg0: i32, %arg1: memref<8x24xf32, #tpu.memory_space<vmem>>, %arg2: memref<8x8xf32, #tpu.memory_space<vmem>>, %arg3: memref<24x32xf32, #tpu.memory_space<vmem>>, %arg4: memref<8x32xf32, #tpu.memory_space<vmem>>, %arg5: memref<1x32xf32, #tpu.memory_space<vmem>>, %arg6: memref<1x32xf32, #tpu.memory_space<vmem>>, %arg7: memref<1x32xf32, #tpu.memory_space<vmem>>, %arg8: memref<32x128xf32, #tpu.memory_space<vmem>>, %arg9: memref<1x128xf32, #tpu.memory_space<vmem>>, %arg10: memref<8x128xf32, #tpu.memory_space<vmem>>) attributes {dimension_semantics = [#tpu.dimension_semantics<parallel>], iteration_bounds = array<i64: 2>, scalar_prefetch = 0 : i64, scratch_operands = 0 : i64, tpu.core_type = #tpu.core_type<tc>, window_params = [{transform_indices = @transform_0, window_bounds = array<i64: 8, 24>}, {transform_indices = @transform_1, window_bounds = array<i64: 8, 8>}, {pipeline_mode = #tpu.pipeline_mode<synchronous>, transform_indices = @transform_2, window_bounds = array<i64: 24, 32>}, {pipeline_mode = #tpu.pipeline_mode<synchronous>, transform_indices = @transform_3, window_bounds = array<i64: 8, 32>}, {pipeline_mode = #tpu.pipeline_mode<synchronous>, transform_indices = @transform_4, window_bounds = array<i64: 1, 32>}, {pipeline_mode = #tpu.pipeline_mode<synchronous>, transform_indices = @transform_5, window_bounds = array<i64: 1, 32>}, {pipeline_mode = #tpu.pipeline_mode<synchronous>, transform_indices = @transform_6, window_bounds = array<i64: 1, 32>}, {pipeline_mode = #tpu.pipeline_mode<synchronous>, transform_indices = @transform_7, window_bounds = array<i64: 32, 128>}, {pipeline_mode = #tpu.pipeline_mode<synchronous>, transform_indices = @transform_8, window_bounds = array<i64: 1, 128>}, {transform_indices = @transform_9, window_bounds = array<i64: 8, 128>}]} {
    %c0 = arith.constant 0 : index
    %c0_0 = arith.constant 0 : index
    %0 = vector.load %arg1[%c0, %c0_0] : memref<8x24xf32, #tpu.memory_space<vmem>>, vector<8x24xf32>
    %c0_1 = arith.constant 0 : index
    %c0_2 = arith.constant 0 : index
    %1 = vector.load %arg3[%c0_1, %c0_2] : memref<24x32xf32, #tpu.memory_space<vmem>>, vector<24x32xf32>
    %cst = arith.constant dense<0.000000e+00> : vector<8x32xf32>
    %2 = tpu.matmul %0, %1, %cst {dimension_numbers = #tpu.dot_dimension_numbers<[1], [0], [0], [1], [0, 0, 1, 1], [], []>} : vector<8x24xf32>, vector<24x32xf32>, vector<8x32xf32> -> vector<8x32xf32>
    %c0_3 = arith.constant 0 : index
    %c0_4 = arith.constant 0 : index
    %3 = vector.load %arg2[%c0_3, %c0_4] : memref<8x8xf32, #tpu.memory_space<vmem>>, vector<8x8xf32>
    %c0_5 = arith.constant 0 : index
    %c0_6 = arith.constant 0 : index
    %4 = vector.load %arg4[%c0_5, %c0_6] : memref<8x32xf32, #tpu.memory_space<vmem>>, vector<8x32xf32>
    %cst_7 = arith.constant dense<0.000000e+00> : vector<8x32xf32>
    %5 = tpu.matmul %3, %4, %cst_7 {dimension_numbers = #tpu.dot_dimension_numbers<[1], [0], [0], [1], [0, 0, 1, 1], [], []>} : vector<8x8xf32>, vector<8x32xf32>, vector<8x32xf32> -> vector<8x32xf32>
    %6 = arith.addf %2, %5 : vector<8x32xf32>
    %c0_8 = arith.constant 0 : index
    %c0_9 = arith.constant 0 : index
    %7 = vector.load %arg5[%c0_8, %c0_9] : memref<1x32xf32, #tpu.memory_space<vmem>>, vector<1x32xf32>
    %8 = vector.broadcast %7 : vector<1x32xf32> to vector<8x32xf32>
    %9 = arith.addf %6, %8 : vector<8x32xf32>
    %10 = math.tanh %9 : vector<8x32xf32>
    %cst_10 = arith.constant dense<0.000000e+00> : vector<8xf32>
    %11 = vector.multi_reduction <add>, %10, %cst_10 [1] : vector<8x32xf32> to vector<8xf32>
    %12 = vector.shape_cast %11 : vector<8xf32> to vector<8x1xf32>
    %13 = arith.mulf %10, %10 : vector<8x32xf32>
    %cst_11 = arith.constant dense<0.000000e+00> : vector<8xf32>
    %14 = vector.multi_reduction <add>, %13, %cst_11 [1] : vector<8x32xf32> to vector<8xf32>
    %15 = vector.shape_cast %14 : vector<8xf32> to vector<8x1xf32>
    %cst_12 = arith.constant 3.125000e-02 : f32
    %16 = vector.broadcast %cst_12 : f32 to vector<8x1xf32>
    %17 = arith.mulf %12, %16 : vector<8x1xf32>
    %cst_13 = arith.constant 3.125000e-02 : f32
    %18 = vector.broadcast %cst_13 : f32 to vector<8x1xf32>
    %19 = arith.mulf %15, %18 : vector<8x1xf32>
    %20 = arith.mulf %17, %17 : vector<8x1xf32>
    %21 = arith.subf %19, %20 : vector<8x1xf32>
    %cst_14 = arith.constant 0.000000e+00 : f32
    %22 = vector.broadcast %cst_14 : f32 to vector<8x1xf32>
    %23 = arith.maximumf %21, %22 : vector<8x1xf32>
    %24 = vector.broadcast %17 : vector<8x1xf32> to vector<8x32xf32>
    %25 = arith.subf %10, %24 : vector<8x32xf32>
    %cst_15 = arith.constant 9.99999974E-6 : f32
    %26 = vector.broadcast %cst_15 : f32 to vector<8x1xf32>
    %27 = arith.addf %23, %26 : vector<8x1xf32>
    %28 = math.rsqrt %27 : vector<8x1xf32>
    %29 = vector.broadcast %28 : vector<8x1xf32> to vector<8x32xf32>
    %30 = arith.mulf %25, %29 : vector<8x32xf32>
    %c0_16 = arith.constant 0 : index
    %c0_17 = arith.constant 0 : index
    %31 = vector.load %arg6[%c0_16, %c0_17] : memref<1x32xf32, #tpu.memory_space<vmem>>, vector<1x32xf32>
    %32 = vector.broadcast %31 : vector<1x32xf32> to vector<8x32xf32>
    %33 = arith.mulf %30, %32 : vector<8x32xf32>
    %c0_18 = arith.constant 0 : index
    %c0_19 = arith.constant 0 : index
    %34 = vector.load %arg7[%c0_18, %c0_19] : memref<1x32xf32, #tpu.memory_space<vmem>>, vector<1x32xf32>
    %35 = vector.broadcast %34 : vector<1x32xf32> to vector<8x32xf32>
    %36 = arith.addf %33, %35 : vector<8x32xf32>
    %c0_20 = arith.constant 0 : index
    %c0_21 = arith.constant 0 : index
    %37 = vector.load %arg8[%c0_20, %c0_21] : memref<32x128xf32, #tpu.memory_space<vmem>>, vector<32x128xf32>
    %cst_22 = arith.constant dense<0.000000e+00> : vector<8x128xf32>
    %38 = tpu.matmul %36, %37, %cst_22 {dimension_numbers = #tpu.dot_dimension_numbers<[1], [0], [0], [1], [0, 0, 1, 1], [], []>} : vector<8x32xf32>, vector<32x128xf32>, vector<8x128xf32> -> vector<8x128xf32>
    %c0_23 = arith.constant 0 : index
    %c0_24 = arith.constant 0 : index
    %39 = vector.load %arg9[%c0_23, %c0_24] : memref<1x128xf32, #tpu.memory_space<vmem>>, vector<1x128xf32>
    %40 = vector.broadcast %39 : vector<1x128xf32> to vector<8x128xf32>
    %41 = arith.addf %38, %40 : vector<8x128xf32>
    %c0_25 = arith.constant 0 : index
    %c0_26 = arith.constant 0 : index
    %42 = vector.load %arg10[%c0_25, %c0_26] : memref<8x128xf32, #tpu.memory_space<vmem>>, vector<8x128xf32>
    tpu.vector_store %arg10[%c0_25, %c0_26], %41 {strides = array<i32>} : memref<8x128xf32, #tpu.memory_space<vmem>>, vector<8x128xf32>,
    return
  }
  func.func @transform_0(%arg0: i32) -> (i32, i32) {
    %c0_i32 = arith.constant 0 : i32
    %c0_i32_0 = arith.constant 0 : i32
    return %arg0, %c0_i32 : i32, i32
  }
  func.func @transform_1(%arg0: i32) -> (i32, i32) {
    %c0_i32 = arith.constant 0 : i32
    %c0_i32_0 = arith.constant 0 : i32
    return %arg0, %c0_i32 : i32, i32
  }
  func.func @transform_2(%arg0: i32) -> (i32, i32) {
    %c0_i32 = arith.constant 0 : i32
    %c0_i32_0 = arith.constant 0 : i32
    %c0_i32_1 = arith.constant 0 : i32
    return %c0_i32, %c0_i32_0 : i32, i32
  }
  func.func @transform_3(%arg0: i32) -> (i32, i32) {
    %c0_i32 = arith.constant 0 : i32
    %c0_i32_0 = arith.constant 0 : i32
    %c0_i32_1 = arith.constant 0 : i32
    return %c0_i32, %c0_i32_0 : i32, i32
  }
  func.func @transform_4(%arg0: i32) -> (i32, i32) {
    %c0_i32 = arith.constant 0 : i32
    %c0_i32_0 = arith.constant 0 : i32
    %c0_i32_1 = arith.constant 0 : i32
    return %c0_i32, %c0_i32_0 : i32, i32
  }
  func.func @transform_5(%arg0: i32) -> (i32, i32) {
    %c0_i32 = arith.constant 0 : i32
    %c0_i32_0 = arith.constant 0 : i32
    %c0_i32_1 = arith.constant 0 : i32
    return %c0_i32, %c0_i32_0 : i32, i32
  }
  func.func @transform_6(%arg0: i32) -> (i32, i32) {
    %c0_i32 = arith.constant 0 : i32
    %c0_i32_0 = arith.constant 0 : i32
    %c0_i32_1 = arith.constant 0 : i32
    return %c0_i32, %c0_i32_0 : i32, i32
  }
  func.func @transform_7(%arg0: i32) -> (i32, i32) {
    %c0_i32 = arith.constant 0 : i32
    %c0_i32_0 = arith.constant 0 : i32
    %c0_i32_1 = arith.constant 0 : i32
    return %c0_i32, %c0_i32_0 : i32, i32
  }
  func.func @transform_8(%arg0: i32) -> (i32, i32) {
    %c0_i32 = arith.constant 0 : i32
    %c0_i32_0 = arith.constant 0 : i32
    %c0_i32_1 = arith.constant 0 : i32
    return %c0_i32, %c0_i32_0 : i32, i32
  }
  func.func @transform_9(%arg0: i32) -> (i32, i32) {
    %c0_i32 = arith.constant 0 : i32
    %c0_i32_0 = arith.constant 0 : i32
    return %arg0, %c0_i32 : i32, i32
  }
}

</mosaic_0001>

<llo_original>
// kernel: pooler_end_logits.1
$region0: #{pooler_end_logits.1}
  #allocation0 [shape = 'u32[]', space=smem, size = 0x4, offset = 0x4, fixed_abs, tag = 'smem constant byte address 0x4 - core index']
  #allocation1 [shape = 'u32[144,128]{1,0:T(1,128)}', space=vmem, size = 0x12000, scoped, tag = 'internal scratch']
  %s0 = inlined_call_operand.vmem [shape: f32[16,24], index: 0, kind: input, shape index: {}]
  %s1 = inlined_call_operand.vmem [shape: f32[16,8], index: 1, kind: input, shape index: {}]
  %s2 = inlined_call_operand.vmem [shape: f32[24,32], index: 2, kind: input, shape index: {}]
  %s3 = inlined_call_operand.vmem [shape: f32[8,32], index: 3, kind: input, shape index: {}]
  %s4 = inlined_call_operand.vmem [shape: f32[1,32], index: 4, kind: input, shape index: {}]
  %s5 = inlined_call_operand.vmem [shape: f32[1,32], index: 5, kind: input, shape index: {}]
  %s6 = inlined_call_operand.vmem [shape: f32[1,32], index: 6, kind: input, shape index: {}]
  %s7 = inlined_call_operand.vmem [shape: f32[32,128], index: 7, kind: input, shape index: {}]
  %s8 = inlined_call_operand.vmem [shape: f32[1,128], index: 8, kind: input, shape index: {}]
  %s9 = inlined_call_operand.vmem [shape: f32[16,128], index: 9, kind: output, shape index: {}]
  %s10 = sld [smem:[#allocation0]]
  $region69: #{pooler_end_logits.1} parent=0
    _
  %s12 = ssub.s32 1, %s10
  %s13 = scalar_select 0, %s12, %s10
  loop: start=0, step=1, limit=4
  $region2: #{pooler_end_logits.1} parent=0 // loop_pre_header
    _
  $region3: #{pooler_end_logits.1} parent=0 // loop_header
    %s15 = sphi 0, %s19
    %p16 = scmp.ge.s32.totalorder %s15, 4
    %s25 = sphi 0, %s27
    %s28 = sphi 0, %s25
    %s29 = sphi 0, %s28
    %s45 = sphi 0, %s29
    %s51 = sphi 0, %s53
    %s54 = sphi 0, %s51
    %s55 = sphi 0, %s54
    %s71 = sphi 0, %s55
    %s75 = sphi 0, %s75
    %s77 = sphi 0, %s75
    %s78 = sphi 0, %s77
    %s92 = sphi 0, %s78
    %s96 = sphi 0, %s96
    %s98 = sphi 0, %s96
    %s99 = sphi 0, %s98
    %s113 = sphi 0, %s99
    %s117 = sphi 0, %s117
    %s119 = sphi 0, %s117
    %s120 = sphi 0, %s119
    %s134 = sphi 0, %s120
    %s138 = sphi 0, %s138
    %s140 = sphi 0, %s138
    %s141 = sphi 0, %s140
    %s155 = sphi 0, %s141
    %s159 = sphi 0, %s159
    %s161 = sphi 0, %s159
    %s162 = sphi 0, %s161
    %s176 = sphi 0, %s162
    %s180 = sphi 0, %s180
    %s182 = sphi 0, %s180
    %s183 = sphi 0, %s182
    %s197 = sphi 0, %s183
    %s201 = sphi 0, %s201
    %s203 = sphi 0, %s201
    %s204 = sphi 0, %s203
    %s218 = sphi 0, %s204
    %s224 = sphi 0, %s226
    %s227 = sphi 0, %s224
    %s228 = sphi 0, %s227
    %s244 = sphi 0, %s228
  $region4: #{pooler_end_logits.1} parent=0 // loop_header_branch
    %18 = sbr.rel (%p16) target = $region8
  $region5: #{pooler_end_logits.1} parent=0 // loop_body
    %s20 = ssub.s32 %s15, 1
    %s21 = ssub.s32 %s15, 2
    %s22 = sadd.s32 %s15, 1
    %s23 = ssub.s32 %s15, %s22
    %p24 = scmp.eq.s32.totalorder %s23, 0
    %s26 = sadd.s32 %s25, 1
    %s27 = scalar_select %p24, %s25, %s26
    %p30 = pneg %p24
    %p31 = scmp.eq.s32.totalorder %s15, 1
    %p32 = por %p30, %p31
    %p33 = scmp.ne.s32.totalorder %s25, %s28
    %p34 = scmp.eq.s32.totalorder %s15, 0
    %p35 = por %p33, %p34
    %p36 = scmp.ne.s32.totalorder %s25, %s28
    %p37 = scmp.eq.s32.totalorder %s20, 1
    %p38 = por %p36, %p37
    %p39 = scmp.ne.s32.totalorder %s28, %s29
    %p40 = scmp.eq.s32.totalorder %s20, 0
    %p41 = por %p39, %p40
    %p42 = scmp.ne.s32.totalorder %s28, %s29
    %p43 = scmp.eq.s32.totalorder %s21, 1
    %p44 = por %p42, %p43
    %p46 = scmp.ne.s32.totalorder %s29, %s45
    %p47 = scmp.eq.s32.totalorder %s21, 0
    %p48 = por %p46, %p47
    %s49 = ssub.s32 %s15, %s22
    %p50 = scmp.eq.s32.totalorder %s49, 0
    %s52 = sadd.s32 %s51, 1
    %s53 = scalar_select %p50, %s51, %s52
    %p56 = pneg %p50
    %p57 = scmp.eq.s32.totalorder %s15, 1
    %p58 = por %p56, %p57
    %p59 = scmp.ne.s32.totalorder %s51, %s54
    %p60 = scmp.eq.s32.totalorder %s15, 0
    %p61 = por %p59, %p60
    %p62 = scmp.ne.s32.totalorder %s51, %s54
    %p63 = scmp.eq.s32.totalorder %s20, 1
    %p64 = por %p62, %p63
    %p65 = scmp.ne.s32.totalorder %s54, %s55
    %p66 = scmp.eq.s32.totalorder %s20, 0
    %p67 = por %p65, %p66
    %p68 = scmp.ne.s32.totalorder %s54, %s55
    %p69 = scmp.eq.s32.totalorder %s21, 1
    %p70 = por %p68, %p69
    %p72 = scmp.ne.s32.totalorder %s55, %s71
    %p73 = scmp.eq.s32.totalorder %s21, 0
    %p74 = por %p72, %p73
    %s76 = sadd.s32 %s75, 1
    %p79 = scmp.eq.s32.totalorder %s15, 1
    %p80 = scmp.ne.s32.totalorder %s75, %s77
    %p81 = scmp.eq.s32.totalorder %s15, 0
    %p82 = por %p80, %p81
    %p83 = scmp.ne.s32.totalorder %s75, %s77
    %p84 = scmp.eq.s32.totalorder %s20, 1
    %p85 = por %p83, %p84
    %p86 = scmp.ne.s32.totalorder %s77, %s78
    %p87 = scmp.eq.s32.totalorder %s20, 0
    %p88 = por %p86, %p87
    %p89 = scmp.ne.s32.totalorder %s77, %s78
    %p90 = scmp.eq.s32.totalorder %s21, 1
    %p91 = por %p89, %p90
    %p93 = scmp.ne.s32.totalorder %s78, %s92
    %p94 = scmp.eq.s32.totalorder %s21, 0
    %p95 = por %p93, %p94
    %s97 = sadd.s32 %s96, 1
    %p100 = scmp.eq.s32.totalorder %s15, 1
    %p101 = scmp.ne.s32.totalorder %s96, %s98
    %p102 = scmp.eq.s32.totalorder %s15, 0
    %p103 = por %p101, %p102
    %p104 = scmp.ne.s32.totalorder %s96, %s98
    %p105 = scmp.eq.s32.totalorder %s20, 1
    %p106 = por %p104, %p105
    %p107 = scmp.ne.s32.totalorder %s98, %s99
    %p108 = scmp.eq.s32.totalorder %s20, 0
    %p109 = por %p107, %p108
    %p110 = scmp.ne.s32.totalorder %s98, %s99
    %p111 = scmp.eq.s32.totalorder %s21, 1
    %p112 = por %p110, %p111
    %p114 = scmp.ne.s32.totalorder %s99, %s113
    %p115 = scmp.eq.s32.totalorder %s21, 0
    %p116 = por %p114, %p115
    %s118 = sadd.s32 %s117, 1
    %p121 = scmp.eq.s32.totalorder %s15, 1
    %p122 = scmp.ne.s32.totalorder %s117, %s119
    %p123 = scmp.eq.s32.totalorder %s15, 0
    %p124 = por %p122, %p123
    %p125 = scmp.ne.s32.totalorder %s117, %s119
    %p126 = scmp.eq.s32.totalorder %s20, 1
    %p127 = por %p125, %p126
    %p128 = scmp.ne.s32.totalorder %s119, %s120
    %p129 = scmp.eq.s32.totalorder %s20, 0
    %p130 = por %p128, %p129
    %p131 = scmp.ne.s32.totalorder %s119, %s120
    %p132 = scmp.eq.s32.totalorder %s21, 1
    %p133 = por %p131, %p132
    %p135 = scmp.ne.s32.totalorder %s120, %s134
    %p136 = scmp.eq.s32.totalorder %s21, 0
    %p137 = por %p135, %p136
    %s139 = sadd.s32 %s138, 1
    %p142 = scmp.eq.s32.totalorder %s15, 1
    %p143 = scmp.ne.s32.totalorder %s138, %s140
    %p144 = scmp.eq.s32.totalorder %s15, 0
    %p145 = por %p143, %p144
    %p146 = scmp.ne.s32.totalorder %s138, %s140
    %p147 = scmp.eq.s32.totalorder %s20, 1
    %p148 = por %p146, %p147
    %p149 = scmp.ne.s32.totalorder %s140, %s141
    %p150 = scmp.eq.s32.totalorder %s20, 0
    %p151 = por %p149, %p150
    %p152 = scmp.ne.s32.totalorder %s140, %s141
    %p153 = scmp.eq.s32.totalorder %s21, 1
    %p154 = por %p152, %p153
    %p156 = scmp.ne.s32.totalorder %s141, %s155
    %p157 = scmp.eq.s32.totalorder %s21, 0
    %p158 = por %p156, %p157
    %s160 = sadd.s32 %s159, 1
    %p163 = scmp.eq.s32.totalorder %s15, 1
    %p164 = scmp.ne.s32.totalorder %s159, %s161
    %p165 = scmp.eq.s32.totalorder %s15, 0
    %p166 = por %p164, %p165
    %p167 = scmp.ne.s32.totalorder %s159, %s161
    %p168 = scmp.eq.s32.totalorder %s20, 1
    %p169 = por %p167, %p168
    %p170 = scmp.ne.s32.totalorder %s161, %s162
    %p171 = scmp.eq.s32.totalorder %s20, 0
    %p172 = por %p170, %p171
    %p173 = scmp.ne.s32.totalorder %s161, %s162
    %p174 = scmp.eq.s32.totalorder %s21, 1
    %p175 = por %p173, %p174
    %p177 = scmp.ne.s32.totalorder %s162, %s176
    %p178 = scmp.eq.s32.totalorder %s21, 0
    %p179 = por %p177, %p178
    %s181 = sadd.s32 %s180, 1
    %p184 = scmp.eq.s32.totalorder %s15, 1
    %p185 = scmp.ne.s32.totalorder %s180, %s182
    %p186 = scmp.eq.s32.totalorder %s15, 0
    %p187 = por %p185, %p186
    %p188 = scmp.ne.s32.totalorder %s180, %s182
    %p189 = scmp.eq.s32.totalorder %s20, 1
    %p190 = por %p188, %p189
    %p191 = scmp.ne.s32.totalorder %s182, %s183
    %p192 = scmp.eq.s32.totalorder %s20, 0
    %p193 = por %p191, %p192
    %p194 = scmp.ne.s32.totalorder %s182, %s183
    %p195 = scmp.eq.s32.totalorder %s21, 1
    %p196 = por %p194, %p195
    %p198 = scmp.ne.s32.totalorder %s183, %s197
    %p199 = scmp.eq.s32.totalorder %s21, 0
    %p200 = por %p198, %p199
    %s202 = sadd.s32 %s201, 1
    %p205 = scmp.eq.s32.totalorder %s15, 1
    %p206 = scmp.ne.s32.totalorder %s201, %s203
    %p207 = scmp.eq.s32.totalorder %s15, 0
    %p208 = por %p206, %p207
    %p209 = scmp.ne.s32.totalorder %s201, %s203
    %p210 = scmp.eq.s32.totalorder %s20, 1
    %p211 = por %p209, %p210
    %p212 = scmp.ne.s32.totalorder %s203, %s204
    %p213 = scmp.eq.s32.totalorder %s20, 0
    %p214 = por %p212, %p213
    %p215 = scmp.ne.s32.totalorder %s203, %s204
    %p216 = scmp.eq.s32.totalorder %s21, 1
    %p217 = por %p215, %p216
    %p219 = scmp.ne.s32.totalorder %s204, %s218
    %p220 = scmp.eq.s32.totalorder %s21, 0
    %p221 = por %p219, %p220
    %s222 = ssub.s32 %s15, %s22
    %p223 = scmp.eq.s32.totalorder %s222, 0
    %s225 = sadd.s32 %s224, 1
    %s226 = scalar_select %p223, %s224, %s225
    %p229 = pneg %p223
    %p230 = scmp.eq.s32.totalorder %s15, 1
    %p231 = por %p229, %p230
    %p232 = scmp.ne.s32.totalorder %s224, %s227
    %p233 = scmp.eq.s32.totalorder %s15, 0
    %p234 = por %p232, %p233
    %p235 = scmp.ne.s32.totalorder %s224, %s227
    %p236 = scmp.eq.s32.totalorder %s20, 1
    %p237 = por %p235, %p236
    %p238 = scmp.ne.s32.totalorder %s227, %s228
    %p239 = scmp.eq.s32.totalorder %s20, 0
    %p240 = por %p238, %p239
    %p241 = scmp.ne.s32.totalorder %s227, %s228
    %p242 = scmp.eq.s32.totalorder %s21, 1
    %p243 = por %p241, %p242
    %p245 = scmp.ne.s32.totalorder %s228, %s244
    %p246 = scmp.eq.s32.totalorder %s21, 0
    %p247 = por %p245, %p246
    %p248 = scmp.le.s32.totalorder 1, %s15
    %p249 = scmp.lt.s32.totalorder %s15, 3
    %p250 = pnand %p248, %p249
    %p251 = pneg %p250
    // Predicated region
    $region9: #{pooler_end_logits.1} parent=5 // pred_check
      _
    $region10: #{pooler_end_logits.1} parent=5 // pred_check_branch
      %253 = sbr.rel (%p250) target = $region12
    $region11: #{pooler_end_logits.1} parent=5 // pred_region
      %s254 = ssub.s32 %s15, 1
      // Predicated region
      $region13: #{pooler_end_logits.1} parent=11 // pred_check
        %p255 = pneg %p88
      $region14: #{pooler_end_logits.1} parent=11 // pred_check_branch
        %257 = sbr.rel (%p255) target = $region16
      $region15: #{pooler_end_logits.1} parent=11 // pred_region
        _
      $region16: #{pooler_end_logits.1} parent=11 // pred_fallthru
        _
      // Predicated region
      $region17: #{pooler_end_logits.1} parent=11 // pred_check
        %p258 = pneg %p109
      $region18: #{pooler_end_logits.1} parent=11 // pred_check_branch
        %260 = sbr.rel (%p258) target = $region20
      $region19: #{pooler_end_logits.1} parent=11 // pred_region
        _
      $region20: #{pooler_end_logits.1} parent=11 // pred_fallthru
        _
      // Predicated region
      $region21: #{pooler_end_logits.1} parent=11 // pred_check
        %p261 = pneg %p130
      $region22: #{pooler_end_logits.1} parent=11 // pred_check_branch
        %263 = sbr.rel (%p261) target = $region24
      $region23: #{pooler_end_logits.1} parent=11 // pred_region
        _
      $region24: #{pooler_end_logits.1} parent=11 // pred_fallthru
        _
      // Predicated region
      $region25: #{pooler_end_logits.1} parent=11 // pred_check
        %p264 = pneg %p151
      $region26: #{pooler_end_logits.1} parent=11 // pred_check_branch
        %266 = sbr.rel (%p264) target = $region28
      $region27: #{pooler_end_logits.1} parent=11 // pred_region
        _
      $region28: #{pooler_end_logits.1} parent=11 // pred_fallthru
        _
      // Predicated region
      $region29: #{pooler_end_logits.1} parent=11 // pred_check
        %p267 = pneg %p172
      $region30: #{pooler_end_logits.1} parent=11 // pred_check_branch
        %269 = sbr.rel (%p267) target = $region32
      $region31: #{pooler_end_logits.1} parent=11 // pred_region
        _
      $region32: #{pooler_end_logits.1} parent=11 // pred_fallthru
        _
      // Predicated region
      $region33: #{pooler_end_logits.1} parent=11 // pred_check
        %p270 = pneg %p193
      $region34: #{pooler_end_logits.1} parent=11 // pred_check_branch
        %272 = sbr.rel (%p270) target = $region36
      $region35: #{pooler_end_logits.1} parent=11 // pred_region
        _
      $region36: #{pooler_end_logits.1} parent=11 // pred_fallthru
        _
      // Predicated region
      $region37: #{pooler_end_logits.1} parent=11 // pred_check
        %p273 = pneg %p214
      $region38: #{pooler_end_logits.1} parent=11 // pred_check_branch
        %275 = sbr.rel (%p273) target = $region40
      $region39: #{pooler_end_logits.1} parent=11 // pred_region
        _
      $region40: #{pooler_end_logits.1} parent=11 // pred_fallthru
        _
    $region12: #{pooler_end_logits.1} parent=5 // pred_fallthru
      _
    %p276 = scmp.lt.s32.totalorder %s15, 2
    // Predicated region
    $region41: #{pooler_end_logits.1} parent=5 // pred_check
      %p277 = pneg %p276
    $region42: #{pooler_end_logits.1} parent=5 // pred_check_branch
      %279 = sbr.rel (%p277) target = $region44
    $region43: #{pooler_end_logits.1} parent=5 // pred_region
      // Predicated region
      $region45: #{pooler_end_logits.1} parent=43 // pred_check
        %p280 = pneg %p35
      $region46: #{pooler_end_logits.1} parent=43 // pred_check_branch
        %282 = sbr.rel (%p280) target = $region48
      $region47: #{pooler_end_logits.1} parent=43 // pred_region
        %p283 = scmp.lt.s32.totalorder %s15, 1
        %s284 = scalar_select %p283, %s15, 1
        %s285 = smul.addr %s284, 8
        %s286 = scalar_lea.vmem %s0, %s285
      $region48: #{pooler_end_logits.1} parent=43 // pred_fallthru
        _
      // Predicated region
      $region49: #{pooler_end_logits.1} parent=43 // pred_check
        %p287 = pneg %p61
      $region50: #{pooler_end_logits.1} parent=43 // pred_check_branch
        %289 = sbr.rel (%p287) target = $region52
      $region51: #{pooler_end_logits.1} parent=43 // pred_region
        %p290 = scmp.lt.s32.totalorder %s15, 1
        %s291 = scalar_select %p290, %s15, 1
        %s292 = smul.addr %s291, 8
        %s293 = scalar_lea.vmem %s1, %s292
      $region52: #{pooler_end_logits.1} parent=43 // pred_fallthru
        _
    $region44: #{pooler_end_logits.1} parent=5 // pred_fallthru
      _
    %p294 = scmp.le.s32.totalorder 1, %s15
    %p295 = scmp.lt.s32.totalorder %s15, 3
    %p296 = pnand %p294, %p295
    %p297 = pneg %p296
    // Predicated region
    $region53: #{pooler_end_logits.1} parent=5 // pred_check
      _
    $region54: #{pooler_end_logits.1} parent=5 // pred_check_branch
      %299 = sbr.rel (%p296) target = $region56
    $region55: #{pooler_end_logits.1} parent=5 // pred_region
      %s300 = ssub.s32 %s15, 1
      %p301 = scmp.lt.s32.totalorder %s20, 1
      %s302 = scalar_select %p301, %s20, 1
      %s303 = smul.addr %s302, 8
      %s304 = scalar_lea.vmem %s0, %s303
      %p305 = pneg %p41
      %p306 = pneg %p38
      %p307 = scmp.lt.s32.totalorder %s20, 1
      %s308 = scalar_select %p307, %s20, 1
      %s309 = smul.addr %s308, 8
      %s310 = scalar_lea.vmem %s1, %s309
      %p311 = pneg %p67
      %p312 = pneg %p64
      %p313 = pneg %p88
      %p314 = pneg %p85
      %p315 = pneg %p109
      %p316 = pneg %p106
      %p317 = pneg %p130
      %p318 = pneg %p127
      %p319 = pneg %p151
      %p320 = pneg %p148
      %p321 = pneg %p172
      %p322 = pneg %p169
      %p323 = pneg %p193
      %p324 = pneg %p190
      %p325 = pneg %p214
      %p326 = pneg %p211
      %p327 = pneg %p240
      %p328 = pneg %p237
      %p329 = scmp.lt.s32.totalorder %s20, 1
      %s330 = scalar_select %p329, %s20, 1
      %s331 = smul.addr %s330, 8
      %s332 = scalar_lea.vmem %s9, %s331
      %p333 = scmp.lt.s32.totalorder %s20, 1
      %s334 = scalar_select %p333, %s20, 1
      %s335 = smul.addr %s334, 8
      %s336 = scalar_lea.vmem %s0, %s335
      %p337 = scmp.lt.s32.totalorder %s20, 1
      %s338 = scalar_select %p337, %s20, 1
      %s339 = smul.addr %s338, 8
      %s340 = scalar_lea.vmem %s1, %s339
      %p341 = scmp.lt.s32.totalorder %s20, 1
      %s342 = scalar_select %p341, %s20, 1
      %s343 = smul.addr %s342, 8
      %s344 = scalar_lea.vmem %s9, %s343
      %v345 = vld [vmem:[%s336] sm:$0xff]
      %v346 = vld [vmem:[%s2] sm:$0xff]
      %v347 = vld [vmem:[%s2 + $0x8] sm:$0xff]
      %v348 = vld [vmem:[%s2 + $0x10] sm:$0xff]
      %v349 = vld [vmem:[%s340] sm:$0xff]
      %v350 = vld [vmem:[%s3] sm:$0xff]
      %vm351 = vcmask 64512
      %v353 = vsel %vm351, %v349, 0
      %355 = vmatprep.subr.mxu0 0.0
      %356 = vmatpush1.msra.mxu0 0.0
      %357 = vmatprep.subr.mxu0 0.0
      %358 = vmatpush1.msra.mxu0 0.0
      %359 = vmatprep.subr.mxu0 0.0
      %360 = vmatpush1.msra.mxu0 0.0
      %361 = vmatprep.subr.mxu0 0.0
      %362 = vmatpush1.msra.mxu0 0.0
      %363 = vmatprep.subr.mxu0 0.0
      %364 = vmatpush1.msra.mxu0 0.0
      %365 = vmatprep.subr.mxu0 0.0
      %366 = vmatpush1.msra.mxu0 0.0
      %367 = vmatprep.subr.mxu0 0.0
      %368 = vmatpush1.msra.mxu0 0.0
      %369 = vmatprep.subr.mxu0 0.0
      %370 = vmatpush1.msra.mxu0 0.0
      %371 = vmatprep.subr.mxu0 0.0
      %372 = vmatpush1.msra.mxu0 0.0
      %373 = vmatprep.subr.mxu0 0.0
      %374 = vmatpush1.msra.mxu0 0.0
      %375 = vmatprep.subr.mxu0 0.0
      %376 = vmatpush1.msra.mxu0 0.0
      %377 = vmatprep.subr.mxu0 0.0
      %378 = vmatpush1.msra.mxu0 0.0
      %379 = vmatprep.subr.mxu0 0.0
      %380 = vmatpush1.msra.mxu0 0.0
      %381 = vmatprep.subr.mxu0 0.0
      %382 = vmatpush1.msra.mxu0 0.0
      %383 = vmatprep.subr.mxu0 0.0
      %384 = vmatpush1.msra.mxu0 0.0
      %385 = vmatprep.subr.mxu0 0.0
      %386 = vmatpush1.msra.mxu0 %v350
      %387 = vmatprep.subr.mxu0 0.0
      %388 = vmatpush2.msra.mxu0 0.0
      %389 = vmatprep.subr.mxu0 0.0
      %390 = vmatpush2.msra.mxu0 0.0
      %391 = vmatprep.subr.mxu0 0.0
      %392 = vmatpush2.msra.mxu0 0.0
      %393 = vmatprep.subr.mxu0 0.0
      %394 = vmatpush2.msra.mxu0 0.0
      %395 = vmatprep.subr.mxu0 0.0
      %396 = vmatpush2.msra.mxu0 0.0
      %397 = vmatprep.subr.mxu0 0.0
      %398 = vmatpush2.msra.mxu0 0.0
      %399 = vmatprep.subr.mxu0 0.0
      %400 = vmatpush2.msra.mxu0 0.0
      %401 = vmatprep.subr.mxu0 0.0
      %402 = vmatpush2.msra.mxu0 0.0
      %403 = vmatprep.subr.mxu0 0.0
      %404 = vmatpush2.msra.mxu0 0.0
      %405 = vmatprep.subr.mxu0 0.0
      %406 = vmatpush2.msra.mxu0 0.0
      %407 = vmatprep.subr.mxu0 0.0
      %408 = vmatpush2.msra.mxu0 0.0
      %409 = vmatprep.subr.mxu0 0.0
      %410 = vmatpush2.msra.mxu0 0.0
      %411 = vmatprep.subr.mxu0 0.0
      %412 = vmatpush2.msra.mxu0 0.0
      %413 = vmatprep.subr.mxu0 0.0
      %414 = vmatpush2.msra.mxu0 0.0
      %415 = vmatprep.subr.mxu0 0.0
      %416 = vmatpush2.msra.mxu0 0.0
      %417 = vmatprep.subr.mxu0 0.0
      %418 = vmatpush2.msra.mxu0 0.0
      %419 = vmatprep.mubr.f32.mxu0 0.0
      %420 = vmatmul.mubr.f32.gmra.mxu0 %v353
      %v421 = vpop.f32.mrf.mxu0
      %v422 = vadd.f32 0.0, %v421
      %v423 = vpop.f32.mrf.mxu0
      %424 = vdwg.mxu0
      %vm425 = vcmask 195584
      %v427 = vsel %vm425, %v345, 0
      %429 = vmatprep.subr.mxu0 0.0
      %430 = vmatpush1.msra.mxu0 0.0
      %431 = vmatprep.subr.mxu0 0.0
      %432 = vmatpush1.msra.mxu0 0.0
      %433 = vmatprep.subr.mxu0 0.0
      %434 = vmatpush1.msra.mxu0 0.0
      %435 = vmatprep.subr.mxu0 0.0
      %436 = vmatpush1.msra.mxu0 0.0
      %437 = vmatprep.subr.mxu0 0.0
      %438 = vmatpush1.msra.mxu0 0.0
      %439 = vmatprep.subr.mxu0 0.0
      %440 = vmatpush1.msra.mxu0 0.0
      %441 = vmatprep.subr.mxu0 0.0
      %442 = vmatpush1.msra.mxu0 0.0
      %443 = vmatprep.subr.mxu0 0.0
      %444 = vmatpush1.msra.mxu0 0.0
      %445 = vmatprep.subr.mxu0 0.0
      %446 = vmatpush1.msra.mxu0 0.0
      %447 = vmatprep.subr.mxu0 0.0
      %448 = vmatpush1.msra.mxu0 0.0
      %449 = vmatprep.subr.mxu0 0.0
      %450 = vmatpush1.msra.mxu0 0.0
      %451 = vmatprep.subr.mxu0 0.0
      %452 = vmatpush1.msra.mxu0 0.0
      %453 = vmatprep.subr.mxu0 0.0
      %454 = vmatpush1.msra.mxu0 0.0
      %455 = vmatprep.subr.mxu0 0.0
      %456 = vmatpush1.msra.mxu0 %v348
      %457 = vmatprep.subr.mxu0 0.0
      %458 = vmatpush1.msra.mxu0 %v347
      %459 = vmatprep.subr.mxu0 0.0
      %460 = vmatpush1.msra.mxu0 %v346
      %461 = vmatprep.subr.mxu0 0.0
      %462 = vmatpush2.msra.mxu0 0.0
      %463 = vmatprep.subr.mxu0 0.0
      %464 = vmatpush2.msra.mxu0 0.0
      %465 = vmatprep.subr.mxu0 0.0
      %466 = vmatpush2.msra.mxu0 0.0
      %467 = vmatprep.subr.mxu0 0.0
      %468 = vmatpush2.msra.mxu0 0.0
      %469 = vmatprep.subr.mxu0 0.0
      %470 = vmatpush2.msra.mxu0 0.0
      %471 = vmatprep.subr.mxu0 0.0
      %472 = vmatpush2.msra.mxu0 0.0
      %473 = vmatprep.subr.mxu0 0.0
      %474 = vmatpush2.msra.mxu0 0.0
      %475 = vmatprep.subr.mxu0 0.0
      %476 = vmatpush2.msra.mxu0 0.0
      %477 = vmatprep.subr.mxu0 0.0
      %478 = vmatpush2.msra.mxu0 0.0
      %479 = vmatprep.subr.mxu0 0.0
      %480 = vmatpush2.msra.mxu0 0.0
      %481 = vmatprep.subr.mxu0 0.0
      %482 = vmatpush2.msra.mxu0 0.0
      %483 = vmatprep.subr.mxu0 0.0
      %484 = vmatpush2.msra.mxu0 0.0
      %485 = vmatprep.subr.mxu0 0.0
      %486 = vmatpush2.msra.mxu0 0.0
      %487 = vmatprep.subr.mxu0 0.0
      %488 = vmatpush2.msra.mxu0 0.0
      %489 = vmatprep.subr.mxu0 0.0
      %490 = vmatpush2.msra.mxu0 0.0
      %491 = vmatprep.subr.mxu0 0.0
      %492 = vmatpush2.msra.mxu0 0.0
      %493 = vmatprep.mubr.f32.mxu0 0.0
      %494 = vmatmul.mubr.f32.gmra.mxu0 %v427
      %v495 = vpop.f32.mrf.mxu0
      %v496 = vadd.f32 %v422, %v495
      %v497 = vpop.f32.mrf.mxu0
      %498 = vdwg.mxu0
      %v499 = vld [vmem:[%s4] sm:$0x1]
      %v501 = vlaneseq
      %v502 = vshrl.u32 %v501, 7
      %v503 = vsub.s32 0, %v502
      %v504 = vrot.slane %v499, %v503
      %v506 = vadd.f32 %v496, %v504
      %v507 = vtanh.pop %v506
      %vm508 = vcmask 261120
      %v509 = vsel %vm508, %v507, 0.0
      %510 = vadd.xlane.f32.xlu0 %v509
      %v511 = vpop.xlane.xlu0 %510
      %v512 = vmul.f32 %v507, %v507
      %v513 = vsel %vm508, %v512, 0.0
      %514 = vadd.xlane.f32.xlu0 %v513
      %v515 = vpop.xlane.xlu0 %514
      %v516 = vmul.f32 %v511, 0.03125
      %v517 = vmul.f32 %v515, 0.03125
      %v518 = vmul.f32 %v516, %v516
      %v519 = vsub.f32 %v517, %v518
      %v520 = vmax.f32 %v519, 0.0
      %v521 = vsub.f32 %v507, %v516
      %v522 = vadd.f32 %v520, 1e-05
      %v523 = vrsqrt.pop %v522
      %v524 = vmul.f32 %v521, %v523
      %v525 = vld [vmem:[%s5] sm:$0x1]
      %v527 = vlaneseq
      %v528 = vshrl.u32 %v527, 7
      %v529 = vsub.s32 0, %v528
      %v530 = vrot.slane %v525, %v529
      %v532 = vmul.f32 %v524, %v530
      %v533 = vld [vmem:[%s6] sm:$0x1]
      %v535 = vlaneseq
      %v536 = vshrl.u32 %v535, 7
      %v537 = vsub.s32 0, %v536
      %v538 = vrot.slane %v533, %v537
      %v540 = vadd.f32 %v532, %v538
      %v541 = vld [vmem:[%s7] sm:$0xff]
      %v542 = vld [vmem:[%s7 + $0x8] sm:$0xff]
      %v543 = vld [vmem:[%s7 + $0x10] sm:$0xff]
      %v544 = vld [vmem:[%s7 + $0x18] sm:$0xff]
      %v545 = vld [vmem:[%s8] sm:$0x1]
      %v547 = vlaneseq
      %v548 = vshrl.u32 %v547, 7
      %v549 = vsub.s32 0, %v548
      %v550 = vrot.slane %v545, %v549
      %v553 = vsel %vm508, %v540, 0
      %555 = vmatprep.subr.mxu0 0.0
      %556 = vmatpush1.msra.mxu0 0.0
      %557 = vmatprep.subr.mxu0 0.0
      %558 = vmatpush1.msra.mxu0 0.0
      %559 = vmatprep.subr.mxu0 0.0
      %560 = vmatpush1.msra.mxu0 0.0
      %561 = vmatprep.subr.mxu0 0.0
      %562 = vmatpush1.msra.mxu0 0.0
      %563 = vmatprep.subr.mxu0 0.0
      %564 = vmatpush1.msra.mxu0 0.0
      %565 = vmatprep.subr.mxu0 0.0
      %566 = vmatpush1.msra.mxu0 0.0
      %567 = vmatprep.subr.mxu0 0.0
      %568 = vmatpush1.msra.mxu0 0.0
      %569 = vmatprep.subr.mxu0 0.0
      %570 = vmatpush1.msra.mxu0 0.0
      %571 = vmatprep.subr.mxu0 0.0
      %572 = vmatpush1.msra.mxu0 0.0
      %573 = vmatprep.subr.mxu0 0.0
      %574 = vmatpush1.msra.mxu0 0.0
      %575 = vmatprep.subr.mxu0 0.0
      %576 = vmatpush1.msra.mxu0 0.0
      %577 = vmatprep.subr.mxu0 0.0
      %578 = vmatpush1.msra.mxu0 0.0
      %579 = vmatprep.subr.mxu0 0.0
      %580 = vmatpush1.msra.mxu0 %v544
      %581 = vmatprep.subr.mxu0 0.0
      %582 = vmatpush1.msra.mxu0 %v543
      %583 = vmatprep.subr.mxu0 0.0
      %584 = vmatpush1.msra.mxu0 %v542
      %585 = vmatprep.subr.mxu0 0.0
      %586 = vmatpush1.msra.mxu0 %v541
      %587 = vmatprep.subr.mxu0 0.0
      %588 = vmatpush2.msra.mxu0 0.0
      %589 = vmatprep.subr.mxu0 0.0
      %590 = vmatpush2.msra.mxu0 0.0
      %591 = vmatprep.subr.mxu0 0.0
      %592 = vmatpush2.msra.mxu0 0.0
      %593 = vmatprep.subr.mxu0 0.0
      %594 = vmatpush2.msra.mxu0 0.0
      %595 = vmatprep.subr.mxu0 0.0
      %596 = vmatpush2.msra.mxu0 0.0
      %597 = vmatprep.subr.mxu0 0.0
      %598 = vmatpush2.msra.mxu0 0.0
      %599 = vmatprep.subr.mxu0 0.0
      %600 = vmatpush2.msra.mxu0 0.0
      %601 = vmatprep.subr.mxu0 0.0
      %602 = vmatpush2.msra.mxu0 0.0
      %603 = vmatprep.subr.mxu0 0.0
      %604 = vmatpush2.msra.mxu0 0.0
      %605 = vmatprep.subr.mxu0 0.0
      %606 = vmatpush2.msra.mxu0 0.0
      %607 = vmatprep.subr.mxu0 0.0
      %608 = vmatpush2.msra.mxu0 0.0
      %609 = vmatprep.subr.mxu0 0.0
      %610 = vmatpush2.msra.mxu0 0.0
      %611 = vmatprep.subr.mxu0 0.0
      %612 = vmatpush2.msra.mxu0 0.0
      %613 = vmatprep.subr.mxu0 0.0
      %614 = vmatpush2.msra.mxu0 0.0
      %615 = vmatprep.subr.mxu0 0.0
      %616 = vmatpush2.msra.mxu0 0.0
      %617 = vmatprep.subr.mxu0 0.0
      %618 = vmatpush2.msra.mxu0 0.0
      %619 = vmatprep.mubr.f32.mxu0 0.0
      %620 = vmatmul.mubr.f32.gmra.mxu0 %v553
      %v621 = vpop.f32.mrf.mxu0
      %v622 = vadd.f32 %v550, %v621
      %v623 = vpop.f32.mrf.mxu0
      %624 = vdwg.mxu0
      %625 = vst [vmem:[%s344] sm:$0xff] %v622
      %p626 = scmp.lt.s32.totalorder %s20, 1
      %s627 = scalar_select %p626, %s20, 1
      %s628 = smul.addr %s627, 8
      %s629 = scalar_lea.vmem %s9, %s628
      // Predicated region
      $region57: #{pooler_end_logits.1} parent=55 // pred_check
        %p630 = pneg %p237
      $region58: #{pooler_end_logits.1} parent=55 // pred_check_branch
        %632 = sbr.rel (%p630) target = $region60
      $region59: #{pooler_end_logits.1} parent=55 // pred_region
        _
      $region60: #{pooler_end_logits.1} parent=55 // pred_fallthru
        _
    $region56: #{pooler_end_logits.1} parent=5 // pred_fallthru
      _
    %p633 = scmp.le.s32.totalorder 2, %s15
    // Predicated region
    $region61: #{pooler_end_logits.1} parent=5 // pred_check
      %p634 = pneg %p633
    $region62: #{pooler_end_logits.1} parent=5 // pred_check_branch
      %636 = sbr.rel (%p634) target = $region64
    $region63: #{pooler_end_logits.1} parent=5 // pred_region
      %s637 = ssub.s32 %s15, 2
      // Predicated region
      $region65: #{pooler_end_logits.1} parent=63 // pred_check
        %p638 = pneg %p243
      $region66: #{pooler_end_logits.1} parent=63 // pred_check_branch
        %640 = sbr.rel (%p638) target = $region68
      $region67: #{pooler_end_logits.1} parent=63 // pred_region
        %p641 = scmp.lt.s32.totalorder %s21, 1
        %s642 = scalar_select %p641, %s21, 1
        %s643 = smul.addr %s642, 8
        %s644 = scalar_lea.vmem %s9, %s643
      $region68: #{pooler_end_logits.1} parent=63 // pred_fallthru
        _
    $region64: #{pooler_end_logits.1} parent=5 // pred_fallthru
      _
  $region6: #{pooler_end_logits.1} parent=0 // loop_footer
    %s19 = sadd.s32 1, %s15
  $region7: #{pooler_end_logits.1} parent=0 // loop_footer_branch
    %14 = sbr.rel target = $region3
  $region8: #{pooler_end_logits.1} parent=0 // loop_exit
    _

</llo_original>
